<compile_context>
chip_gen: v7x
topology: tpu7x:2x2x1
jax: 0.10.0
libtpu: 0.0.40
codegen_flags: <defaults>
</compile_context>

<pallas_src>
import jax
import jax.numpy as jnp
from jax.experimental import pallas as pl
from jax.experimental.pallas import tpu as pltpu

EPS = 1e-5  # PyTorch InstanceNorm2d default


def _make_kernel(bt, C, H, W, pad_l, eps):
    HW = H * W
    inv_hw = 1.0 / float(HW)
    # tap order must match the (Cout, ky, kx, Cin) flattening of the weights
    taps = [((ky - 1) * W + (kx - 1), kx - 1) for ky in range(3) for kx in range(3)]

    def kernel(x_ref, w1_ref, w2_ref, o_ref, pad_ref):
        # ---- zero the two lane-aligned halo regions (2 vregs; per grid step
        # because the VMEM scratch is per-core under "parallel" sharding) ----
        halo = jnp.zeros((C, pad_l), jnp.float32)
        pad_ref[:, 0:pad_l] = halo
        pad_ref[:, pad_l + HW:pad_l + HW + pad_l] = halo

        # x-coordinate of every flattened pixel (left/right column masks),
        # hoisted out of the per-image loop (image independent)
        xpos = jax.lax.broadcasted_iota(jnp.int32, (C, HW), 1) % W
        not_left = xpos >= 1           # valid when the tap shifts left  (dx=-1)
        not_right = xpos <= W - 2      # valid when the tap shifts right (dx=+1)

        def conv3x3(w_ref):
            # 3x3 "same" conv as ONE K=9*C MXU matmul over im2col patches.
            # (conv bias omitted: it is cancelled exactly by the InstanceNorm
            # mean subtraction that always follows.)
            cols = []
            for s, dx in taps:
                t = pad_ref[:, pad_l + s:pad_l + s + HW]       # (C, HW)
                if dx == -1:
                    t = jnp.where(not_left, t, 0.0)
                elif dx == 1:
                    t = jnp.where(not_right, t, 0.0)
                cols.append(t)
            patches = jnp.concatenate(cols, axis=0)            # (9C, HW)
            return jax.lax.dot_general(
                w_ref[...], patches,
                dimension_numbers=(((1,), (0,)), ((), ())),
                preferred_element_type=jnp.float32)            # (C, HW)

        def instance_norm(y):
            # one-pass stats: mean and E[x^2] in a single sweep over HW lanes
            mean = jnp.sum(y, axis=1, keepdims=True) * inv_hw
            ex2 = jnp.sum(y * y, axis=1, keepdims=True) * inv_hw
            var = jnp.maximum(ex2 - mean * mean, 0.0)
            return (y - mean) * jax.lax.rsqrt(var + eps)

        for b in range(bt):                                    # static, small
            x_img = x_ref[b].astype(jnp.float32)               # (C, HW)
            # conv1 -> norm -> relu  (padded input lives in pad_ref interior)
            pad_ref[:, pad_l:pad_l + HW] = x_img
            y1 = jnp.maximum(instance_norm(conv3x3(w1_ref)), 0.0)
            # conv2 -> norm (reuse the same padded scratch; halos still zero)
            pad_ref[:, pad_l:pad_l + HW] = y1
            y2 = instance_norm(conv3x3(w2_ref))
            # residual + relu, lane-dense (HW-wide) store
            o_ref[b] = jnp.maximum(y2 + x_img, 0.0).astype(o_ref.dtype)

    return kernel


def renet_block(x_nchw, w1, b1, w2, b2, *, bt=None):
    """x_nchw: (B, C, H, W); w*: (Cout, Cin, 3, 3) OIHW; b*: (Cout,). Cin==Cout.

    b1/b2 are accepted for API parity with the PyTorch module but are not fed
    to the kernel: InstanceNorm2d(affine=False) removes a per-channel constant
    exactly, so the conv biases have no effect on the block's output.
    """
    B, C, H, W = x_nchw.shape
    assert w1.shape == (C, C, 3, 3) and w2.shape == (C, C, 3, 3), \
        "residual block requires infil == outfil"
    HW = H * W
    pad_l = ((W + 1 + 127) // 128) * 128      # lane-aligned halo >= W+1

    # images per grid step: amortize per-step overhead, but keep >= 2 steps
    # when possible so both TensorCores get work (megacore sharding).
    if bt is None:
        bt = 1
        for cand in (8, 4, 2):
            if B % cand == 0 and B // cand >= 2:
                bt = cand
                break
    assert B % bt == 0, "batch must be divisible by the batch tile"

    # free, contiguous reshapes — no transpose, no HBM padding copy
    x_flat = x_nchw.reshape(B, C, HW)
    # OIHW -> (Cout, ky, kx, Cin) -> (Cout, 9*Cin): im2col weight matrix
    wm1 = jnp.transpose(w1, (0, 2, 3, 1)).reshape(C, 9 * C).astype(jnp.float32)
    wm2 = jnp.transpose(w2, (0, 2, 3, 1)).reshape(C, 9 * C).astype(jnp.float32)

    kernel = _make_kernel(bt, C, H, W, pad_l, EPS)

    # explicit VMEM budget: double-buffered in/out blocks + scratch + weights
    est = (4 * (4 * bt * C * HW)              # in + out blocks, double-buffered
           + 4 * C * (HW + 2 * pad_l)         # padded-flat scratch
           + 4 * (4 * C * 9 * C)              # weight matrices (double-buffered)
           + 4 * (9 * C * HW)                 # im2col patches temporary
           + (2 << 20))                       # slack for compiler temporaries
    vmem_budget = min(max(est, 16 << 20), 48 << 20)

    out_flat = pl.pallas_call(
        kernel,
        out_shape=jax.ShapeDtypeStruct((B, C, HW), x_nchw.dtype),
        grid_spec=pltpu.PrefetchScalarGridSpec(
            num_scalar_prefetch=0,
            grid=(B // bt,),
            in_specs=[
                pl.BlockSpec((bt, C, HW), lambda i: (i, 0, 0)),
                pl.BlockSpec((C, 9 * C), lambda i: (0, 0)),
                pl.BlockSpec((C, 9 * C), lambda i: (0, 0)),
            ],
            out_specs=pl.BlockSpec((bt, C, HW), lambda i: (i, 0, 0)),
            scratch_shapes=[pltpu.VMEM((C, HW + 2 * pad_l), jnp.float32)],
        ),
        compiler_params=pltpu.CompilerParams(
            dimension_semantics=("parallel",),
            vmem_limit_bytes=vmem_budget),
    )(x_flat, wm1, wm2)

    return out_flat.reshape(B, C, H, W)


def ref_forward(x, w1, b1, w2, b2, eps=EPS):
    """Pure-JAX reference mirroring the PyTorch module (NCHW)."""
    def conv(x, w, b):
        y = jax.lax.conv_general_dilated(
            x, w, window_strides=(1, 1), padding="SAME",
            dimension_numbers=("NCHW", "OIHW", "NCHW"))
        return y + b[None, :, None, None]

    def inorm(y):
        m = jnp.mean(y, axis=(2, 3), keepdims=True)
        v = jnp.mean((y - m) ** 2, axis=(2, 3), keepdims=True)
        return (y - m) / jnp.sqrt(v + eps)

    out = jnp.maximum(inorm(conv(x, w1, b1)), 0.0)
    out = inorm(conv(out, w2, b2))
    return jnp.maximum(out + x, 0.0)


if __name__ == "__main__":
    B, C, H, W = 2, 8, 16, 16  # infil == outfil == C (required for residual)

    key = jax.random.PRNGKey(0)
    kx, kw1, kb1, kw2, kb2 = jax.random.split(key, 5)

    x = jax.random.normal(kx, (B, C, H, W), dtype=jnp.float32)
    fan_in = C * 3 * 3
    w1 = jax.random.normal(kw1, (C, C, 3, 3), jnp.float32) / jnp.sqrt(fan_in)
    b1 = 0.1 * jax.random.normal(kb1, (C,), jnp.float32)
    w2 = jax.random.normal(kw2, (C, C, 3, 3), jnp.float32) / jnp.sqrt(fan_in)
    b2 = 0.1 * jax.random.normal(kb2, (C,), jnp.float32)

    out = jax.block_until_ready(renet_block(x, w1, b1, w2, b2))
    ref = jax.block_until_ready(ref_forward(x, w1, b1, w2, b2))

    assert out.shape == x.shape and out.dtype == x.dtype
    err = float(jnp.max(jnp.abs(out - ref)))
    assert jnp.allclose(out, ref, atol=1e-3, rtol=1e-3), err

    print("KERNEL_OK")
</pallas_src>

<mosaic_0001>
module attributes {stable_mosaic.version = 11 : i64} {
  func.func @kernel(%arg0: i32, %arg1: memref<1x8x256xf32, #tpu.memory_space<vmem>>, %arg2: memref<8x72xf32, #tpu.memory_space<vmem>>, %arg3: memref<8x72xf32, #tpu.memory_space<vmem>>, %arg4: memref<1x8x256xf32, #tpu.memory_space<vmem>>, %arg5: memref<8x512xf32, #tpu.memory_space<vmem>>) attributes {dimension_semantics = [#tpu.dimension_semantics<parallel>], iteration_bounds = array<i64: 2>, scalar_prefetch = 0 : i64, scratch_operands = 1 : i64, tpu.core_type = #tpu.core_type<tc>, window_params = [{transform_indices = @transform_0, window_bounds = array<i64: 1, 8, 256>}, {pipeline_mode = #tpu.pipeline_mode<synchronous>, transform_indices = @transform_1, window_bounds = array<i64: 8, 72>}, {pipeline_mode = #tpu.pipeline_mode<synchronous>, transform_indices = @transform_2, window_bounds = array<i64: 8, 72>}, {transform_indices = @transform_3, window_bounds = array<i64: 1, 8, 256>}]} {
    %cst = arith.constant 0.000000e+00 : f32
    %0 = vector.broadcast %cst : f32 to vector<8x128xf32>
    %c0 = arith.constant 0 : index
    %c0_0 = arith.constant 0 : index
    %1 = vector.load %arg5[%c0, %c0_0] : memref<8x512xf32, #tpu.memory_space<vmem>>, vector<8x128xf32>
    tpu.vector_store %arg5[%c0, %c0_0], %0 {strides = array<i32>} : memref<8x512xf32, #tpu.memory_space<vmem>>, vector<8x128xf32>,
    %c0_1 = arith.constant 0 : index
    %c384 = arith.constant 384 : index
    %2 = vector.load %arg5[%c0_1, %c384] : memref<8x512xf32, #tpu.memory_space<vmem>>, vector<8x128xf32>
    tpu.vector_store %arg5[%c0_1, %c384], %0 {strides = array<i32>} : memref<8x512xf32, #tpu.memory_space<vmem>>, vector<8x128xf32>,
    %3 = tpu.iota {dimensions = array<i32: 1>} : vector<8x256xi32>
    %c16_i32 = arith.constant 16 : i32
    %c0_i32 = arith.constant 0 : i32
    %4 = arith.cmpi eq, %c16_i32, %c0_i32 : i32
    %c1_i32 = arith.constant 1 : i32
    %5 = arith.select %4, %c1_i32, %c16_i32 : i32
    %6 = vector.broadcast %5 : i32 to vector<8x256xi32>
    %7 = arith.remsi %3, %6 : vector<8x256xi32>
    %c0_i32_2 = arith.constant 0 : i32
    %8 = vector.broadcast %c0_i32_2 : i32 to vector<8x256xi32>
    %9 = arith.cmpi ne, %7, %8 : vector<8x256xi32>
    %c0_i32_3 = arith.constant 0 : i32
    %10 = vector.broadcast %c0_i32_3 : i32 to vector<8x256xi32>
    %11 = arith.cmpi slt, %7, %10 : vector<8x256xi32>
    %c0_i32_4 = arith.constant 0 : i32
    %12 = arith.cmpi slt, %5, %c0_i32_4 : i32
    %13 = vector.broadcast %12 : i1 to vector<8x256xi1>
    %14 = vector.broadcast %13 : vector<8x256xi1> to vector<8x256xi1>
    %15 = arith.xori %11, %14 : vector<8x256xi1>
    %16 = arith.andi %15, %9 : vector<8x256xi1>
    %17 = vector.broadcast %5 : i32 to vector<8x256xi32>
    %18 = arith.addi %7, %17 : vector<8x256xi32>
    %19 = arith.select %16, %18, %7 : vector<8x256xi1>, vector<8x256xi32>
    %c1_i32_5 = arith.constant 1 : i32
    %20 = vector.broadcast %c1_i32_5 : i32 to vector<8x256xi32>
    %21 = arith.cmpi sge, %19, %20 : vector<8x256xi32>
    %c14_i32 = arith.constant 14 : i32
    %22 = vector.broadcast %c14_i32 : i32 to vector<8x256xi32>
    %23 = arith.cmpi sle, %19, %22 : vector<8x256xi32>
    %c0_6 = arith.constant 0 : index
    %c0_7 = arith.constant 0 : index
    %c0_8 = arith.constant 0 : index
    %24 = vector.load %arg1[%c0_6, %c0_7, %c0_8] : memref<1x8x256xf32, #tpu.memory_space<vmem>>, vector<1x8x256xf32>
    %25 = vector.shape_cast %24 : vector<1x8x256xf32> to vector<8x256xf32>
    %c0_9 = arith.constant 0 : index
    %c128 = arith.constant 128 : index
    %26 = vector.load %arg5[%c0_9, %c128] : memref<8x512xf32, #tpu.memory_space<vmem>>, vector<8x256xf32>
    tpu.vector_store %arg5[%c0_9, %c128], %25 {strides = array<i32>} : memref<8x512xf32, #tpu.memory_space<vmem>>, vector<8x256xf32>,
    %c0_10 = arith.constant 0 : index
    %c111 = arith.constant 111 : index
    %27 = vector.load %arg5[%c0_10, %c111] : memref<8x512xf32, #tpu.memory_space<vmem>>, vector<8x256xf32>
    %cst_11 = arith.constant 0.000000e+00 : f32
    %28 = vector.broadcast %cst_11 : f32 to vector<8x256xf32>
    %29 = arith.select %21, %27, %28 : vector<8x256xi1>, vector<8x256xf32>
    %c0_12 = arith.constant 0 : index
    %c112 = arith.constant 112 : index
    %30 = vector.load %arg5[%c0_12, %c112] : memref<8x512xf32, #tpu.memory_space<vmem>>, vector<8x256xf32>
    %c0_13 = arith.constant 0 : index
    %c113 = arith.constant 113 : index
    %31 = vector.load %arg5[%c0_13, %c113] : memref<8x512xf32, #tpu.memory_space<vmem>>, vector<8x256xf32>
    %cst_14 = arith.constant 0.000000e+00 : f32
    %32 = vector.broadcast %cst_14 : f32 to vector<8x256xf32>
    %33 = arith.select %23, %31, %32 : vector<8x256xi1>, vector<8x256xf32>
    %c0_15 = arith.constant 0 : index
    %c127 = arith.constant 127 : index
    %34 = vector.load %arg5[%c0_15, %c127] : memref<8x512xf32, #tpu.memory_space<vmem>>, vector<8x256xf32>
    %cst_16 = arith.constant 0.000000e+00 : f32
    %35 = vector.broadcast %cst_16 : f32 to vector<8x256xf32>
    %36 = arith.select %21, %34, %35 : vector<8x256xi1>, vector<8x256xf32>
    %c0_17 = arith.constant 0 : index
    %c128_18 = arith.constant 128 : index
    %37 = vector.load %arg5[%c0_17, %c128_18] : memref<8x512xf32, #tpu.memory_space<vmem>>, vector<8x256xf32>
    %c0_19 = arith.constant 0 : index
    %c129 = arith.constant 129 : index
    %38 = vector.load %arg5[%c0_19, %c129] : memref<8x512xf32, #tpu.memory_space<vmem>>, vector<8x256xf32>
    %cst_20 = arith.constant 0.000000e+00 : f32
    %39 = vector.broadcast %cst_20 : f32 to vector<8x256xf32>
    %40 = arith.select %23, %38, %39 : vector<8x256xi1>, vector<8x256xf32>
    %c0_21 = arith.constant 0 : index
    %c143 = arith.constant 143 : index
    %41 = vector.load %arg5[%c0_21, %c143] : memref<8x512xf32, #tpu.memory_space<vmem>>, vector<8x256xf32>
    %cst_22 = arith.constant 0.000000e+00 : f32
    %42 = vector.broadcast %cst_22 : f32 to vector<8x256xf32>
    %43 = arith.select %21, %41, %42 : vector<8x256xi1>, vector<8x256xf32>
    %c0_23 = arith.constant 0 : index
    %c144 = arith.constant 144 : index
    %44 = vector.load %arg5[%c0_23, %c144] : memref<8x512xf32, #tpu.memory_space<vmem>>, vector<8x256xf32>
    %c0_24 = arith.constant 0 : index
    %c145 = arith.constant 145 : index
    %45 = vector.load %arg5[%c0_24, %c145] : memref<8x512xf32, #tpu.memory_space<vmem>>, vector<8x256xf32>
    %cst_25 = arith.constant 0.000000e+00 : f32
    %46 = vector.broadcast %cst_25 : f32 to vector<8x256xf32>
    %47 = arith.select %23, %45, %46 : vector<8x256xi1>, vector<8x256xf32>
    %48 = tpu.concatenate %29, %30, %33, %36, %37, %40, %43, %44, %47 in 0 : vector<8x256xf32>, vector<8x256xf32>, vector<8x256xf32>, vector<8x256xf32>, vector<8x256xf32>, vector<8x256xf32>, vector<8x256xf32>, vector<8x256xf32>, vector<8x256xf32> -> vector<72x256xf32>
    %c0_26 = arith.constant 0 : index
    %c0_27 = arith.constant 0 : index
    %49 = vector.load %arg2[%c0_26, %c0_27] : memref<8x72xf32, #tpu.memory_space<vmem>>, vector<8x72xf32>
    %cst_28 = arith.constant dense<0.000000e+00> : vector<8x256xf32>
    %50 = tpu.matmul %49, %48, %cst_28 {dimension_numbers = #tpu.dot_dimension_numbers<[1], [0], [0], [1], [0, 0, 1, 1], [], []>} : vector<8x72xf32>, vector<72x256xf32>, vector<8x256xf32> -> vector<8x256xf32>
    %cst_29 = arith.constant dense<0.000000e+00> : vector<8xf32>
    %51 = vector.multi_reduction <add>, %50, %cst_29 [1] : vector<8x256xf32> to vector<8xf32>
    %52 = vector.shape_cast %51 : vector<8xf32> to vector<8x1xf32>
    %cst_30 = arith.constant 3.906250e-03 : f32
    %53 = vector.broadcast %cst_30 : f32 to vector<8x1xf32>
    %54 = arith.mulf %52, %53 : vector<8x1xf32>
    %55 = arith.mulf %50, %50 : vector<8x256xf32>
    %cst_31 = arith.constant dense<0.000000e+00> : vector<8xf32>
    %56 = vector.multi_reduction <add>, %55, %cst_31 [1] : vector<8x256xf32> to vector<8xf32>
    %57 = vector.shape_cast %56 : vector<8xf32> to vector<8x1xf32>
    %cst_32 = arith.constant 3.906250e-03 : f32
    %58 = vector.broadcast %cst_32 : f32 to vector<8x1xf32>
    %59 = arith.mulf %57, %58 : vector<8x1xf32>
    %60 = arith.mulf %54, %54 : vector<8x1xf32>
    %61 = arith.subf %59, %60 : vector<8x1xf32>
    %cst_33 = arith.constant 0.000000e+00 : f32
    %62 = vector.broadcast %cst_33 : f32 to vector<8x1xf32>
    %63 = arith.maximumf %61, %62 : vector<8x1xf32>
    %64 = vector.broadcast %54 : vector<8x1xf32> to vector<8x256xf32>
    %65 = arith.subf %50, %64 : vector<8x256xf32>
    %cst_34 = arith.constant 9.99999974E-6 : f32
    %66 = vector.broadcast %cst_34 : f32 to vector<8x1xf32>
    %67 = arith.addf %63, %66 : vector<8x1xf32>
    %68 = math.rsqrt %67 : vector<8x1xf32>
    %69 = vector.broadcast %68 : vector<8x1xf32> to vector<8x256xf32>
    %70 = arith.mulf %65, %69 : vector<8x256xf32>
    %cst_35 = arith.constant 0.000000e+00 : f32
    %71 = vector.broadcast %cst_35 : f32 to vector<8x256xf32>
    %72 = arith.maximumf %70, %71 : vector<8x256xf32>
    %c0_36 = arith.constant 0 : index
    %c128_37 = arith.constant 128 : index
    %73 = vector.load %arg5[%c0_36, %c128_37] : memref<8x512xf32, #tpu.memory_space<vmem>>, vector<8x256xf32>
    tpu.vector_store %arg5[%c0_36, %c128_37], %72 {strides = array<i32>} : memref<8x512xf32, #tpu.memory_space<vmem>>, vector<8x256xf32>,
    %c0_38 = arith.constant 0 : index
    %c111_39 = arith.constant 111 : index
    %74 = vector.load %arg5[%c0_38, %c111_39] : memref<8x512xf32, #tpu.memory_space<vmem>>, vector<8x256xf32>
    %cst_40 = arith.constant 0.000000e+00 : f32
    %75 = vector.broadcast %cst_40 : f32 to vector<8x256xf32>
    %76 = arith.select %21, %74, %75 : vector<8x256xi1>, vector<8x256xf32>
    %c0_41 = arith.constant 0 : index
    %c112_42 = arith.constant 112 : index
    %77 = vector.load %arg5[%c0_41, %c112_42] : memref<8x512xf32, #tpu.memory_space<vmem>>, vector<8x256xf32>
    %c0_43 = arith.constant 0 : index
    %c113_44 = arith.constant 113 : index
    %78 = vector.load %arg5[%c0_43, %c113_44] : memref<8x512xf32, #tpu.memory_space<vmem>>, vector<8x256xf32>
    %cst_45 = arith.constant 0.000000e+00 : f32
    %79 = vector.broadcast %cst_45 : f32 to vector<8x256xf32>
    %80 = arith.select %23, %78, %79 : vector<8x256xi1>, vector<8x256xf32>
    %c0_46 = arith.constant 0 : index
    %c127_47 = arith.constant 127 : index
    %81 = vector.load %arg5[%c0_46, %c127_47] : memref<8x512xf32, #tpu.memory_space<vmem>>, vector<8x256xf32>
    %cst_48 = arith.constant 0.000000e+00 : f32
    %82 = vector.broadcast %cst_48 : f32 to vector<8x256xf32>
    %83 = arith.select %21, %81, %82 : vector<8x256xi1>, vector<8x256xf32>
    %c0_49 = arith.constant 0 : index
    %c128_50 = arith.constant 128 : index
    %84 = vector.load %arg5[%c0_49, %c128_50] : memref<8x512xf32, #tpu.memory_space<vmem>>, vector<8x256xf32>
    %c0_51 = arith.constant 0 : index
    %c129_52 = arith.constant 129 : index
    %85 = vector.load %arg5[%c0_51, %c129_52] : memref<8x512xf32, #tpu.memory_space<vmem>>, vector<8x256xf32>
    %cst_53 = arith.constant 0.000000e+00 : f32
    %86 = vector.broadcast %cst_53 : f32 to vector<8x256xf32>
    %87 = arith.select %23, %85, %86 : vector<8x256xi1>, vector<8x256xf32>
    %c0_54 = arith.constant 0 : index
    %c143_55 = arith.constant 143 : index
    %88 = vector.load %arg5[%c0_54, %c143_55] : memref<8x512xf32, #tpu.memory_space<vmem>>, vector<8x256xf32>
    %cst_56 = arith.constant 0.000000e+00 : f32
    %89 = vector.broadcast %cst_56 : f32 to vector<8x256xf32>
    %90 = arith.select %21, %88, %89 : vector<8x256xi1>, vector<8x256xf32>
    %c0_57 = arith.constant 0 : index
    %c144_58 = arith.constant 144 : index
    %91 = vector.load %arg5[%c0_57, %c144_58] : memref<8x512xf32, #tpu.memory_space<vmem>>, vector<8x256xf32>
    %c0_59 = arith.constant 0 : index
    %c145_60 = arith.constant 145 : index
    %92 = vector.load %arg5[%c0_59, %c145_60] : memref<8x512xf32, #tpu.memory_space<vmem>>, vector<8x256xf32>
    %cst_61 = arith.constant 0.000000e+00 : f32
    %93 = vector.broadcast %cst_61 : f32 to vector<8x256xf32>
    %94 = arith.select %23, %92, %93 : vector<8x256xi1>, vector<8x256xf32>
    %95 = tpu.concatenate %76, %77, %80, %83, %84, %87, %90, %91, %94 in 0 : vector<8x256xf32>, vector<8x256xf32>, vector<8x256xf32>, vector<8x256xf32>, vector<8x256xf32>, vector<8x256xf32>, vector<8x256xf32>, vector<8x256xf32>, vector<8x256xf32> -> vector<72x256xf32>
    %c0_62 = arith.constant 0 : index
    %c0_63 = arith.constant 0 : index
    %96 = vector.load %arg3[%c0_62, %c0_63] : memref<8x72xf32, #tpu.memory_space<vmem>>, vector<8x72xf32>
    %cst_64 = arith.constant dense<0.000000e+00> : vector<8x256xf32>
    %97 = tpu.matmul %96, %95, %cst_64 {dimension_numbers = #tpu.dot_dimension_numbers<[1], [0], [0], [1], [0, 0, 1, 1], [], []>} : vector<8x72xf32>, vector<72x256xf32>, vector<8x256xf32> -> vector<8x256xf32>
    %cst_65 = arith.constant dense<0.000000e+00> : vector<8xf32>
    %98 = vector.multi_reduction <add>, %97, %cst_65 [1] : vector<8x256xf32> to vector<8xf32>
    %99 = vector.shape_cast %98 : vector<8xf32> to vector<8x1xf32>
    %cst_66 = arith.constant 3.906250e-03 : f32
    %100 = vector.broadcast %cst_66 : f32 to vector<8x1xf32>
    %101 = arith.mulf %99, %100 : vector<8x1xf32>
    %102 = arith.mulf %97, %97 : vector<8x256xf32>
    %cst_67 = arith.constant dense<0.000000e+00> : vector<8xf32>
    %103 = vector.multi_reduction <add>, %102, %cst_67 [1] : vector<8x256xf32> to vector<8xf32>
    %104 = vector.shape_cast %103 : vector<8xf32> to vector<8x1xf32>
    %cst_68 = arith.constant 3.906250e-03 : f32
    %105 = vector.broadcast %cst_68 : f32 to vector<8x1xf32>
    %106 = arith.mulf %104, %105 : vector<8x1xf32>
    %107 = arith.mulf %101, %101 : vector<8x1xf32>
    %108 = arith.subf %106, %107 : vector<8x1xf32>
    %cst_69 = arith.constant 0.000000e+00 : f32
    %109 = vector.broadcast %cst_69 : f32 to vector<8x1xf32>
    %110 = arith.maximumf %108, %109 : vector<8x1xf32>
    %111 = vector.broadcast %101 : vector<8x1xf32> to vector<8x256xf32>
    %112 = arith.subf %97, %111 : vector<8x256xf32>
    %cst_70 = arith.constant 9.99999974E-6 : f32
    %113 = vector.broadcast %cst_70 : f32 to vector<8x1xf32>
    %114 = arith.addf %110, %113 : vector<8x1xf32>
    %115 = math.rsqrt %114 : vector<8x1xf32>
    %116 = vector.broadcast %115 : vector<8x1xf32> to vector<8x256xf32>
    %117 = arith.mulf %112, %116 : vector<8x256xf32>
    %118 = arith.addf %117, %25 : vector<8x256xf32>
    %cst_71 = arith.constant 0.000000e+00 : f32
    %119 = vector.broadcast %cst_71 : f32 to vector<8x256xf32>
    %120 = arith.maximumf %118, %119 : vector<8x256xf32>
    %c0_72 = arith.constant 0 : index
    %c0_73 = arith.constant 0 : index
    %c0_74 = arith.constant 0 : index
    %121 = vector.load %arg4[%c0_72, %c0_73, %c0_74] : memref<1x8x256xf32, #tpu.memory_space<vmem>>, vector<1x8x256xf32>
    %122 = vector.shape_cast %121 : vector<1x8x256xf32> to vector<8x256xf32>
    %123 = vector.shape_cast %120 : vector<8x256xf32> to vector<1x8x256xf32>
    tpu.vector_store %arg4[%c0_72, %c0_73, %c0_74], %123 {strides = array<i32>} : memref<1x8x256xf32, #tpu.memory_space<vmem>>, vector<1x8x256xf32>,
    return
  }
  func.func @transform_0(%arg0: i32) -> (i32, i32, i32) {
    %c0_i32 = arith.constant 0 : i32
    %c0_i32_0 = arith.constant 0 : i32
    %c0_i32_1 = arith.constant 0 : i32
    return %arg0, %c0_i32, %c0_i32_0 : i32, i32, i32
  }
  func.func @transform_1(%arg0: i32) -> (i32, i32) {
    %c0_i32 = arith.constant 0 : i32
    %c0_i32_0 = arith.constant 0 : i32
    %c0_i32_1 = arith.constant 0 : i32
    return %c0_i32, %c0_i32_0 : i32, i32
  }
  func.func @transform_2(%arg0: i32) -> (i32, i32) {
    %c0_i32 = arith.constant 0 : i32
    %c0_i32_0 = arith.constant 0 : i32
    %c0_i32_1 = arith.constant 0 : i32
    return %c0_i32, %c0_i32_0 : i32, i32
  }
  func.func @transform_3(%arg0: i32) -> (i32, i32, i32) {
    %c0_i32 = arith.constant 0 : i32
    %c0_i32_0 = arith.constant 0 : i32
    %c0_i32_1 = arith.constant 0 : i32
    return %arg0, %c0_i32, %c0_i32_0 : i32, i32, i32
  }
}

</mosaic_0001>

<llo_original>
// kernel: tpu_custom_call.1
$region0: #{tpu_custom_call.1}
  #allocation0 [shape = 'u32[]', space=smem, size = 0x4, offset = 0x4, fixed_abs, tag = 'smem constant byte address 0x4 - core index']
  #allocation1 [shape = 'u32[144,128]{1,0:T(1,128)}', space=vmem, size = 0x12000, scoped, tag = 'internal scratch']
  #allocation2 [shape = 'f32[8,512]{1,0:T(8,128)}', space=vmem, size = 0x4000, scoped, tag = 'scratch operand']
  %s0 = inlined_call_operand.hbm [shape: f32[2,8,256], index: 0, kind: input, shape index: {}]
  %s1 = inlined_call_operand.hbm [shape: f32[8,72], index: 1, kind: input, shape index: {}]
  %s2 = inlined_call_operand.hbm [shape: f32[8,72], index: 2, kind: input, shape index: {}]
  %s3 = inlined_call_operand.hbm [shape: f32[2,8,256], index: 3, kind: output, shape index: {}]
  %s4 = sld [smem:[#allocation0]]
  $region57: #{tpu_custom_call.1} parent=0
    _
  %s6 = ssub.s32 1, %s4
  %s7 = scalar_select 0, %s6, %s4
  $region1: #{tpu_custom_call.1} parent=0
    #allocation3 [shape = 'u8[16384]{0}', space=vmem, size = 0x4000, scoped, tag = 'input window, operand 0']
    #allocation4 [shape = 's32[2]{0}', space=sflag, size = 0x8, scoped, tag = 'scoped memory for tpu_custom_call.1']
    #allocation5 [shape = 's32[2]{0}', space=sflag, size = 0x8, scoped, tag = 'scoped memory for tpu_custom_call.1']
    #allocation6 [shape = 'u8[4096]{0}', space=vmem, size = 0x1000, scoped, tag = 'input window, operand 1, single buffered']
    #allocation7 [shape = 's32[1]{0}', space=sflag, size = 0x4, scoped, tag = 'scoped memory for tpu_custom_call.1']
    #allocation8 [shape = 'u8[4096]{0}', space=vmem, size = 0x1000, scoped, tag = 'input window, operand 2, single buffered']
    #allocation9 [shape = 'u8[16384]{0}', space=vmem, size = 0x4000, scoped, tag = 'output window, operand 0']
    %8 = vsyncpa [#allocation4], 0
    %s9 = scalar_lea.sflag [#allocation4], 1
    %10 = vsyncpa %s9, 0
    %11 = vsyncpa [#allocation7], 0
    %12 = vsyncpa [#allocation5], 0
    %s13 = scalar_lea.sflag [#allocation5], 1
    %14 = vsyncpa %s13, 0
    loop: start=0, step=1, limit=4
    $region2: #{tpu_custom_call.1} parent=1 // loop_pre_header
      _
    $region3: #{tpu_custom_call.1} parent=1 // loop_header
      %s16 = sphi 0, %s20
      %p17 = scmp.ge.s32.totalorder %s16, 4
      %s26 = sphi 0, %s28
      %s29 = sphi 0, %s26
      %s30 = sphi 0, %s29
      %s46 = sphi 0, %s30
      %s50 = sphi 0, %s50
      %s52 = sphi 0, %s50
      %s53 = sphi 0, %s52
      %s67 = sphi 0, %s53
      %s71 = sphi 0, %s71
      %s73 = sphi 0, %s71
      %s74 = sphi 0, %s73
      %s88 = sphi 0, %s74
      %s94 = sphi 0, %s96
      %s97 = sphi 0, %s94
      %s98 = sphi 0, %s97
      %s114 = sphi 0, %s98
    $region4: #{tpu_custom_call.1} parent=1 // loop_header_branch
      %19 = sbr.rel (%p17) target = $region8
    $region5: #{tpu_custom_call.1} parent=1 // loop_body
      %s21 = ssub.s32 %s16, 1
      %s22 = ssub.s32 %s16, 2
      %s23 = sadd.s32 %s16, 1
      %s24 = ssub.s32 %s16, %s23
      %p25 = scmp.eq.s32.totalorder %s24, 0
      %s27 = sadd.s32 %s26, 1
      %s28 = scalar_select %p25, %s26, %s27
      %p31 = pneg %p25
      %p32 = scmp.eq.s32.totalorder %s16, 1
      %p33 = por %p31, %p32
      %p34 = scmp.ne.s32.totalorder %s26, %s29
      %p35 = scmp.eq.s32.totalorder %s16, 0
      %p36 = por %p34, %p35
      %p37 = scmp.ne.s32.totalorder %s26, %s29
      %p38 = scmp.eq.s32.totalorder %s21, 1
      %p39 = por %p37, %p38
      %p40 = scmp.ne.s32.totalorder %s29, %s30
      %p41 = scmp.eq.s32.totalorder %s21, 0
      %p42 = por %p40, %p41
      %p43 = scmp.ne.s32.totalorder %s29, %s30
      %p44 = scmp.eq.s32.totalorder %s22, 1
      %p45 = por %p43, %p44
      %p47 = scmp.ne.s32.totalorder %s30, %s46
      %p48 = scmp.eq.s32.totalorder %s22, 0
      %p49 = por %p47, %p48
      %s51 = sadd.s32 %s50, 1
      %p54 = scmp.eq.s32.totalorder %s16, 1
      %p55 = scmp.ne.s32.totalorder %s50, %s52
      %p56 = scmp.eq.s32.totalorder %s16, 0
      %p57 = por %p55, %p56
      %p58 = scmp.ne.s32.totalorder %s50, %s52
      %p59 = scmp.eq.s32.totalorder %s21, 1
      %p60 = por %p58, %p59
      %p61 = scmp.ne.s32.totalorder %s52, %s53
      %p62 = scmp.eq.s32.totalorder %s21, 0
      %p63 = por %p61, %p62
      %p64 = scmp.ne.s32.totalorder %s52, %s53
      %p65 = scmp.eq.s32.totalorder %s22, 1
      %p66 = por %p64, %p65
      %p68 = scmp.ne.s32.totalorder %s53, %s67
      %p69 = scmp.eq.s32.totalorder %s22, 0
      %p70 = por %p68, %p69
      %s72 = sadd.s32 %s71, 1
      %p75 = scmp.eq.s32.totalorder %s16, 1
      %p76 = scmp.ne.s32.totalorder %s71, %s73
      %p77 = scmp.eq.s32.totalorder %s16, 0
      %p78 = por %p76, %p77
      %p79 = scmp.ne.s32.totalorder %s71, %s73
      %p80 = scmp.eq.s32.totalorder %s21, 1
      %p81 = por %p79, %p80
      %p82 = scmp.ne.s32.totalorder %s73, %s74
      %p83 = scmp.eq.s32.totalorder %s21, 0
      %p84 = por %p82, %p83
      %p85 = scmp.ne.s32.totalorder %s73, %s74
      %p86 = scmp.eq.s32.totalorder %s22, 1
      %p87 = por %p85, %p86
      %p89 = scmp.ne.s32.totalorder %s74, %s88
      %p90 = scmp.eq.s32.totalorder %s22, 0
      %p91 = por %p89, %p90
      %s92 = ssub.s32 %s16, %s23
      %p93 = scmp.eq.s32.totalorder %s92, 0
      %s95 = sadd.s32 %s94, 1
      %s96 = scalar_select %p93, %s94, %s95
      %p99 = pneg %p93
      %p100 = scmp.eq.s32.totalorder %s16, 1
      %p101 = por %p99, %p100
      %p102 = scmp.ne.s32.totalorder %s94, %s97
      %p103 = scmp.eq.s32.totalorder %s16, 0
      %p104 = por %p102, %p103
      %p105 = scmp.ne.s32.totalorder %s94, %s97
      %p106 = scmp.eq.s32.totalorder %s21, 1
      %p107 = por %p105, %p106
      %p108 = scmp.ne.s32.totalorder %s97, %s98
      %p109 = scmp.eq.s32.totalorder %s21, 0
      %p110 = por %p108, %p109
      %p111 = scmp.ne.s32.totalorder %s97, %s98
      %p112 = scmp.eq.s32.totalorder %s22, 1
      %p113 = por %p111, %p112
      %p115 = scmp.ne.s32.totalorder %s98, %s114
      %p116 = scmp.eq.s32.totalorder %s22, 0
      %p117 = por %p115, %p116
      %p118 = scmp.le.s32.totalorder 1, %s16
      %p119 = scmp.lt.s32.totalorder %s16, 3
      %p120 = pnand %p118, %p119
      %p121 = pneg %p120
      // Predicated region
      $region9: #{tpu_custom_call.1} parent=5 // pred_check
        _
      $region10: #{tpu_custom_call.1} parent=5 // pred_check_branch
        %123 = sbr.rel (%p120) target = $region12
      $region11: #{tpu_custom_call.1} parent=5 // pred_region
        %s124 = ssub.s32 %s16, 1
        // Predicated region
        $region13: #{tpu_custom_call.1} parent=11 // pred_check
          %p125 = pneg %p63
        $region14: #{tpu_custom_call.1} parent=11 // pred_check_branch
          %127 = sbr.rel (%p125) target = $region16
        $region15: #{tpu_custom_call.1} parent=11 // pred_region
          %s129 = ssub.s32 128, 128
          %130 = vsyncadd [#allocation7], %s129
          %s132 = sshll.u32 [#allocation6], 4
          %s133 = int_to_ptr.vmem [resolvable:$true] %s132
          %135 = dma.hbm_to_vmem [thread:$0]  %s1, 128, %s133, [#allocation7]
        $region16: #{tpu_custom_call.1} parent=11 // pred_fallthru
          _
        // Predicated region
        $region17: #{tpu_custom_call.1} parent=11 // pred_check
          %p136 = pneg %p84
        $region18: #{tpu_custom_call.1} parent=11 // pred_check_branch
          %138 = sbr.rel (%p136) target = $region20
        $region19: #{tpu_custom_call.1} parent=11 // pred_region
          %s140 = ssub.s32 128, 128
          %141 = vsyncadd [#allocation7], %s140
          %s143 = sshll.u32 [#allocation8], 4
          %s144 = int_to_ptr.vmem [resolvable:$true] %s143
          %146 = dma.hbm_to_vmem [thread:$0]  %s2, 128, %s144, [#allocation7]
        $region20: #{tpu_custom_call.1} parent=11 // pred_fallthru
          _
      $region12: #{tpu_custom_call.1} parent=5 // pred_fallthru
        _
      %p147 = scmp.lt.s32.totalorder %s16, 2
      // Predicated region
      $region21: #{tpu_custom_call.1} parent=5 // pred_check
        %p148 = pneg %p147
      $region22: #{tpu_custom_call.1} parent=5 // pred_check_branch
        %150 = sbr.rel (%p148) target = $region24
      $region23: #{tpu_custom_call.1} parent=5 // pred_region
        // Predicated region
        $region25: #{tpu_custom_call.1} parent=23 // pred_check
          %p151 = pneg %p36
        $region26: #{tpu_custom_call.1} parent=23 // pred_check_branch
          %153 = sbr.rel (%p151) target = $region28
        $region27: #{tpu_custom_call.1} parent=23 // pred_region
          %s154 = sand.u32 %s26, 1
          %s155 = scalar_lea.sflag [#allocation4], %s154
          %s156 = sand.u32 %s26, 1
          %s157 = smul.addr %s156, 16
          %s158 = scalar_lea.vmem [#allocation3], %s157
          %s160 = ssub.s32 256, 256
          %161 = vsyncadd %s155, %s160
          %s162 = smul.addr %s16, 2
          %s163 = smul.addr %s162, 128
          %s164 = scalar_lea.hbm %s0, %s163
          %s166 = sshll.u32 %s158, 4
          %s167 = int_to_ptr.vmem [resolvable:$true] %s166
          %169 = dma.hbm_to_vmem [thread:$0]  %s164, 256, %s167, %s155
        $region28: #{tpu_custom_call.1} parent=23 // pred_fallthru
          _
      $region24: #{tpu_custom_call.1} parent=5 // pred_fallthru
        _
      %p170 = scmp.le.s32.totalorder 1, %s16
      %p171 = scmp.lt.s32.totalorder %s16, 3
      %p172 = pnand %p170, %p171
      %p173 = pneg %p172
      // Predicated region
      $region29: #{tpu_custom_call.1} parent=5 // pred_check
        _
      $region30: #{tpu_custom_call.1} parent=5 // pred_check_branch
        %175 = sbr.rel (%p172) target = $region32
      $region31: #{tpu_custom_call.1} parent=5 // pred_region
        %s176 = ssub.s32 %s16, 1
        %s177 = sand.u32 %s29, 1
        %s178 = scalar_lea.sflag [#allocation4], %s177
        %s179 = sand.u32 %s29, 1
        %s180 = smul.addr %s179, 16
        %s181 = scalar_lea.vmem [#allocation3], %s180
        // Predicated region
        $region33: #{tpu_custom_call.1} parent=31 // pred_check
          %p182 = pneg %p42
        $region34: #{tpu_custom_call.1} parent=31 // pred_check_branch
          %184 = sbr.rel (%p182) target = $region36
        $region35: #{tpu_custom_call.1} parent=31 // pred_region
          %185 = dma.done %s178, 256
        $region36: #{tpu_custom_call.1} parent=31 // pred_fallthru
          _
        // Predicated region
        $region37: #{tpu_custom_call.1} parent=31 // pred_check
          %p186 = pneg %p63
        $region38: #{tpu_custom_call.1} parent=31 // pred_check_branch
          %188 = sbr.rel (%p186) target = $region40
        $region39: #{tpu_custom_call.1} parent=31 // pred_region
          %189 = dma.done [#allocation7], 128
        $region40: #{tpu_custom_call.1} parent=31 // pred_fallthru
          _
        // Predicated region
        $region41: #{tpu_custom_call.1} parent=31 // pred_check
          %p190 = pneg %p84
        $region42: #{tpu_custom_call.1} parent=31 // pred_check_branch
          %192 = sbr.rel (%p190) target = $region44
        $region43: #{tpu_custom_call.1} parent=31 // pred_region
          %193 = dma.done [#allocation7], 128
        $region44: #{tpu_custom_call.1} parent=31 // pred_fallthru
          _
        %s194 = sand.u32 %s29, 1
        %s195 = scalar_lea.sflag [#allocation4], %s194
        %s196 = sand.u32 %s29, 1
        %s197 = smul.addr %s196, 16
        %s198 = scalar_lea.vmem [#allocation3], %s197
        %p199 = pneg %p42
        %p200 = pneg %p39
        %p201 = pneg %p63
        %p202 = pneg %p60
        %p203 = pneg %p84
        %p204 = pneg %p81
        %p205 = pneg %p110
        %p206 = pneg %p107
        %s207 = sand.u32 %s97, 1
        %s208 = scalar_lea.sflag [#allocation5], %s207
        %s209 = sand.u32 %s97, 1
        %s210 = smul.addr %s209, 16
        %s211 = scalar_lea.vmem [#allocation9], %s210
        %212 = vst [vmem:[#allocation2] sm:$0xff] 0.0
        %213 = vst [vmem:[#allocation2 + $0x18] sm:$0xff] 0.0
        %v214 = vlaneseq
        %v215 = vand.u32 %v214, 127
        %v216 = vadd.s32 %v215, 128
        %vm217 = vcmp.lt.s32.totalorder %v215, 0
        %v218 = vsub.s32 0, %v215
        %v219 = vsel %vm217, %v218, %v215
        %v220 = vshrl.u32 %v219, 4
        %v221 = vand.u32 %v219, 15
        %v222 = vsub.s32 0, %v221
        %v223 = vsel %vm217, %v222, %v221
        %vm224 = vcmp.lt.s32.totalorder %v216, 0
        %v225 = vsub.s32 0, %v216
        %v226 = vsel %vm224, %v225, %v216
        %v227 = vshrl.u32 %v226, 4
        %v228 = vand.u32 %v226, 15
        %v229 = vsub.s32 0, %v228
        %v230 = vsel %vm224, %v229, %v228
        %vm231 = vcmp.ne.s32.totalorder %v223, 0
        %vm232 = vcmp.ne.s32.totalorder %v230, 0
        %vm233 = vcmp.lt.s32.totalorder %v223, 0
        %vm234 = vcmp.lt.s32.totalorder %v230, 0
        %vm235 = vmand %vm233, %vm231
        %vm236 = vmand %vm234, %vm232
        %v237 = vadd.s32 %v223, 16
        %v238 = vadd.s32 %v230, 16
        %v239 = vsel %vm235, %v237, %v223
        %v240 = vsel %vm236, %v238, %v230
        %vm241 = vcmp.ge.s32.totalorder %v239, 1
        %vm242 = vcmp.ge.s32.totalorder %v240, 1
        %vm243 = vcmp.le.s32.totalorder %v239, 14
        %vm244 = vcmp.le.s32.totalorder %v240, 14
        %v245 = vld [vmem:[%s181] sm:$0xff]
        %v246 = vld [vmem:[%s181 + $0x8] sm:$0xff]
        %247 = vst [vmem:[#allocation2 + $0x8] sm:$0xff] %v245
        %248 = vst [vmem:[#allocation2 + $0x10] sm:$0xff] %v246
        %v249 = vld [vmem:[#allocation2] sm:$0xff]
        %v250 = vld [vmem:[#allocation2 + $0x8] sm:$0xff]
        %v251 = vld [vmem:[#allocation2 + $0x10] sm:$0xff]
        %255 = vrot.lane.b32.xlu0 %v249, 17
        %v256 = vpop.permute.xlu0 %255
        %257 = vrot.lane.b32.xlu0 %v250, 17
        %v258 = vpop.permute.xlu0 %257
        %259 = vrot.lane.b32.xlu0 %v251, 17
        %v260 = vpop.permute.xlu0 %259
        %vm261 = vcmask 138240
        %v262 = vsel %vm261, %v256, %v258
        %v263 = vsel %vm261, %v258, %v260
        %v266 = vsel %vm241, %v262, 0.0
        %v267 = vsel %vm242, %v263, 0.0
        %268 = vrot.lane.b32.xlu0 %v249, 15
        %v269 = vpop.permute.xlu0 %268
        %270 = vrot.lane.b32.xlu0 %v250, 15
        %v271 = vpop.permute.xlu0 %270
        %272 = vrot.lane.b32.xlu0 %v251, 15
        %v273 = vpop.permute.xlu0 %272
        %vm274 = vcmask 121856
        %v275 = vsel %vm274, %v269, %v271
        %v276 = vsel %vm274, %v271, %v273
        %v279 = vsel %vm243, %v275, 0.0
        %v280 = vsel %vm244, %v276, 0.0
        %281 = vrot.lane.b32.xlu0 %v249, 1
        %v282 = vpop.permute.xlu0 %281
        %283 = vrot.lane.b32.xlu0 %v250, 1
        %v284 = vpop.permute.xlu0 %283
        %285 = vrot.lane.b32.xlu0 %v251, 1
        %v286 = vpop.permute.xlu0 %285
        %vm287 = vcmask 7168
        %v288 = vsel %vm287, %v282, %v284
        %v289 = vsel %vm287, %v284, %v286
        %v292 = vsel %vm241, %v288, 0.0
        %v293 = vsel %vm242, %v289, 0.0
        %v294 = vld [vmem:[#allocation2 + $0x8] sm:$0xff]
        %v295 = vld [vmem:[#allocation2 + $0x10] sm:$0xff]
        %v296 = vld [vmem:[#allocation2 + $0x18] sm:$0xff]
        %300 = vrot.lane.b32.xlu0 %v294, 127
        %v301 = vpop.permute.xlu0 %300
        %302 = vrot.lane.b32.xlu0 %v295, 127
        %v303 = vpop.permute.xlu0 %302
        %304 = vrot.lane.b32.xlu0 %v296, 127
        %v305 = vpop.permute.xlu0 %304
        %vm306 = vcmask 1039360
        %v307 = vsel %vm306, %v301, %v303
        %v308 = vsel %vm306, %v303, %v305
        %v311 = vsel %vm243, %v307, 0.0
        %v312 = vsel %vm244, %v308, 0.0
        %313 = vrot.lane.b32.xlu0 %v294, 113
        %v314 = vpop.permute.xlu0 %313
        %315 = vrot.lane.b32.xlu0 %v295, 113
        %v316 = vpop.permute.xlu0 %315
        %317 = vrot.lane.b32.xlu0 %v296, 113
        %v318 = vpop.permute.xlu0 %317
        %vm319 = vcmask 924672
        %v320 = vsel %vm319, %v314, %v316
        %v321 = vsel %vm319, %v316, %v318
        %v324 = vsel %vm241, %v320, 0.0
        %v325 = vsel %vm242, %v321, 0.0
        %326 = vrot.lane.b32.xlu0 %v294, 111
        %v327 = vpop.permute.xlu0 %326
        %328 = vrot.lane.b32.xlu0 %v295, 111
        %v329 = vpop.permute.xlu0 %328
        %330 = vrot.lane.b32.xlu0 %v296, 111
        %v331 = vpop.permute.xlu0 %330
        %vm332 = vcmask 908288
        %v333 = vsel %vm332, %v327, %v329
        %v334 = vsel %vm332, %v329, %v331
        %v337 = vsel %vm243, %v333, 0.0
        %v338 = vsel %vm244, %v334, 0.0
        %339 = vrot.lane.b32.xlu0 %v249, 16
        %v340 = vpop.permute.xlu0 %339
        %341 = vrot.lane.b32.xlu0 %v250, 16
        %v342 = vpop.permute.xlu0 %341
        %343 = vrot.lane.b32.xlu0 %v251, 16
        %v344 = vpop.permute.xlu0 %343
        %vm345 = vcmask 130048
        %v346 = vsel %vm345, %v340, %v342
        %v347 = vsel %vm345, %v342, %v344
        %350 = vrot.lane.b32.xlu0 %v294, 112
        %v351 = vpop.permute.xlu0 %350
        %352 = vrot.lane.b32.xlu0 %v295, 112
        %v353 = vpop.permute.xlu0 %352
        %354 = vrot.lane.b32.xlu0 %v296, 112
        %v355 = vpop.permute.xlu0 %354
        %vm356 = vcmask 916480
        %v357 = vsel %vm356, %v351, %v353
        %v358 = vsel %vm356, %v353, %v355
        %v361 = vld [vmem:[#allocation6] sm:$0xff]
        %vm362 = vcmask 588800
        %v364 = vsel %vm362, %v361, 0
        %366 = vmatprep.subr.mxu0 %v267
        %367 = vmatpush1.msra.mxu0 %v266
        %368 = vmatprep.subr.mxu0 %v347
        %369 = vmatpush1.msra.mxu0 %v346
        %370 = vmatprep.subr.mxu0 %v280
        %371 = vmatpush1.msra.mxu0 %v279
        %372 = vmatprep.subr.mxu0 %v293
        %373 = vmatpush1.msra.mxu0 %v292
        %374 = vmatprep.subr.mxu0 %v251
        %375 = vmatpush1.msra.mxu0 %v250
        %376 = vmatprep.subr.mxu0 %v312
        %377 = vmatpush1.msra.mxu0 %v311
        %378 = vmatprep.subr.mxu0 %v325
        %379 = vmatpush1.msra.mxu0 %v324
        %380 = vmatprep.subr.mxu0 %v358
        %381 = vmatpush1.msra.mxu0 %v357
        %382 = vmatprep.subr.mxu0 %v338
        %383 = vmatpush1.msra.mxu0 %v337
        %384 = vmatprep.subr.mxu0 0.0
        %385 = vmatpush1.msra.mxu0 0.0
        %386 = vmatprep.subr.mxu0 0.0
        %387 = vmatpush1.msra.mxu0 0.0
        %388 = vmatprep.subr.mxu0 0.0
        %389 = vmatpush1.msra.mxu0 0.0
        %390 = vmatprep.subr.mxu0 0.0
        %391 = vmatpush1.msra.mxu0 0.0
        %392 = vmatprep.subr.mxu0 0.0
        %393 = vmatpush1.msra.mxu0 0.0
        %394 = vmatprep.subr.mxu0 0.0
        %395 = vmatpush1.msra.mxu0 0.0
        %396 = vmatprep.subr.mxu0 0.0
        %397 = vmatpush1.msra.mxu0 0.0
        %398 = vmatprep.subr.mxu0 0.0
        %399 = vmatpush1.msra.mxu0 0.0
        %400 = vmatprep.subr.mxu0 0.0
        %401 = vmatpush1.msra.mxu0 0.0
        %402 = vmatprep.subr.mxu0 0.0
        %403 = vmatpush1.msra.mxu0 0.0
        %404 = vmatprep.subr.mxu0 0.0
        %405 = vmatpush1.msra.mxu0 0.0
        %406 = vmatprep.subr.mxu0 0.0
        %407 = vmatpush1.msra.mxu0 0.0
        %408 = vmatprep.subr.mxu0 0.0
        %409 = vmatpush1.msra.mxu0 0.0
        %410 = vmatprep.subr.mxu0 0.0
        %411 = vmatpush1.msra.mxu0 0.0
        %412 = vmatprep.subr.mxu0 0.0
        %413 = vmatpush1.msra.mxu0 0.0
        %414 = vmatprep.subr.mxu0 0.0
        %415 = vmatpush1.msra.mxu0 0.0
        %416 = vmatprep.subr.mxu0 0.0
        %417 = vmatpush1.msra.mxu0 0.0
        %418 = vmatprep.subr.mxu0 0.0
        %419 = vmatpush1.msra.mxu0 0.0
        %420 = vmatprep.subr.mxu0 0.0
        %421 = vmatpush1.msra.mxu0 0.0
        %422 = vmatprep.subr.mxu0 0.0
        %423 = vmatpush1.msra.mxu0 0.0
        %424 = vmatprep.subr.mxu0 0.0
        %425 = vmatpush1.msra.mxu0 0.0
        %426 = vmatprep.subr.mxu0 0.0
        %427 = vmatpush1.msra.mxu0 0.0
        %428 = vmatprep.subr.mxu0 0.0
        %429 = vmatpush1.msra.mxu0 0.0
        %430 = vmatprep.mubr.f32.mxu0 0.0
        %431 = vmatmul.mubr.f32.gmra.mrb[0].mxu0 %v364
        %v432 = vpop.f32.mrb[0].mxu0
        %v433 = vadd.f32 0.0, %v432
        %v434 = vpop.f32.mrb[0].mxu0
        %v435 = vadd.f32 0.0, %v434
        %436 = vdwg.mxu0
        %v437 = vadd.f32 %v433, %v435
        %438 = vadd.xlane.f32.xlu0 %v437
        %v439 = vpop.xlane.xlu0 %438
        %v440 = vmul.f32 %v439, 0.00390625
        %v441 = vmul.f32 %v433, %v433
        %v442 = vmul.f32 %v435, %v435
        %v443 = vadd.f32 %v441, %v442
        %444 = vadd.xlane.f32.xlu0 %v443
        %v445 = vpop.xlane.xlu0 %444
        %v446 = vmul.f32 %v445, 0.00390625
        %v447 = vmul.f32 %v440, %v440
        %v448 = vsub.f32 %v446, %v447
        %v449 = vmax.f32 %v448, 0.0
        %v450 = vsub.f32 %v433, %v440
        %v451 = vsub.f32 %v435, %v440
        %v452 = vadd.f32 %v449, 1e-05
        %v453 = vrsqrt.pop %v452
        %v454 = vmul.f32 %v450, %v453
        %v455 = vmul.f32 %v451, %v453
        %v456 = vmax.f32 %v454, 0.0
        %v457 = vmax.f32 %v455, 0.0
        %458 = vst [vmem:[#allocation2 + $0x8] sm:$0xff] %v456
        %459 = vst [vmem:[#allocation2 + $0x10] sm:$0xff] %v457
        %v460 = vld [vmem:[#allocation2] sm:$0xff]
        %v461 = vld [vmem:[#allocation2 + $0x8] sm:$0xff]
        %v462 = vld [vmem:[#allocation2 + $0x10] sm:$0xff]
        %466 = vrot.lane.b32.xlu0 %v460, 17
        %v467 = vpop.permute.xlu0 %466
        %468 = vrot.lane.b32.xlu0 %v461, 17
        %v469 = vpop.permute.xlu0 %468
        %470 = vrot.lane.b32.xlu0 %v462, 17
        %v471 = vpop.permute.xlu0 %470
        %v472 = vsel %vm261, %v467, %v469
        %v473 = vsel %vm261, %v469, %v471
        %v476 = vsel %vm241, %v472, 0.0
        %v477 = vsel %vm242, %v473, 0.0
        %478 = vrot.lane.b32.xlu0 %v460, 15
        %v479 = vpop.permute.xlu0 %478
        %480 = vrot.lane.b32.xlu0 %v461, 15
        %v481 = vpop.permute.xlu0 %480
        %482 = vrot.lane.b32.xlu0 %v462, 15
        %v483 = vpop.permute.xlu0 %482
        %v484 = vsel %vm274, %v479, %v481
        %v485 = vsel %vm274, %v481, %v483
        %v488 = vsel %vm243, %v484, 0.0
        %v489 = vsel %vm244, %v485, 0.0
        %490 = vrot.lane.b32.xlu0 %v460, 1
        %v491 = vpop.permute.xlu0 %490
        %492 = vrot.lane.b32.xlu0 %v461, 1
        %v493 = vpop.permute.xlu0 %492
        %494 = vrot.lane.b32.xlu0 %v462, 1
        %v495 = vpop.permute.xlu0 %494
        %v496 = vsel %vm287, %v491, %v493
        %v497 = vsel %vm287, %v493, %v495
        %v500 = vsel %vm241, %v496, 0.0
        %v501 = vsel %vm242, %v497, 0.0
        %v502 = vld [vmem:[#allocation2 + $0x8] sm:$0xff]
        %v503 = vld [vmem:[#allocation2 + $0x10] sm:$0xff]
        %v504 = vld [vmem:[#allocation2 + $0x18] sm:$0xff]
        %508 = vrot.lane.b32.xlu0 %v502, 127
        %v509 = vpop.permute.xlu0 %508
        %510 = vrot.lane.b32.xlu0 %v503, 127
        %v511 = vpop.permute.xlu0 %510
        %512 = vrot.lane.b32.xlu0 %v504, 127
        %v513 = vpop.permute.xlu0 %512
        %v514 = vsel %vm306, %v509, %v511
        %v515 = vsel %vm306, %v511, %v513
        %v518 = vsel %vm243, %v514, 0.0
        %v519 = vsel %vm244, %v515, 0.0
        %520 = vrot.lane.b32.xlu0 %v502, 113
        %v521 = vpop.permute.xlu0 %520
        %522 = vrot.lane.b32.xlu0 %v503, 113
        %v523 = vpop.permute.xlu0 %522
        %524 = vrot.lane.b32.xlu0 %v504, 113
        %v525 = vpop.permute.xlu0 %524
        %v526 = vsel %vm319, %v521, %v523
        %v527 = vsel %vm319, %v523, %v525
        %v530 = vsel %vm241, %v526, 0.0
        %v531 = vsel %vm242, %v527, 0.0
        %532 = vrot.lane.b32.xlu0 %v502, 111
        %v533 = vpop.permute.xlu0 %532
        %534 = vrot.lane.b32.xlu0 %v503, 111
        %v535 = vpop.permute.xlu0 %534
        %536 = vrot.lane.b32.xlu0 %v504, 111
        %v537 = vpop.permute.xlu0 %536
        %v538 = vsel %vm332, %v533, %v535
        %v539 = vsel %vm332, %v535, %v537
        %v542 = vsel %vm243, %v538, 0.0
        %v543 = vsel %vm244, %v539, 0.0
        %544 = vrot.lane.b32.xlu0 %v460, 16
        %v545 = vpop.permute.xlu0 %544
        %546 = vrot.lane.b32.xlu0 %v461, 16
        %v547 = vpop.permute.xlu0 %546
        %548 = vrot.lane.b32.xlu0 %v462, 16
        %v549 = vpop.permute.xlu0 %548
        %v550 = vsel %vm345, %v545, %v547
        %v551 = vsel %vm345, %v547, %v549
        %554 = vrot.lane.b32.xlu0 %v502, 112
        %v555 = vpop.permute.xlu0 %554
        %556 = vrot.lane.b32.xlu0 %v503, 112
        %v557 = vpop.permute.xlu0 %556
        %558 = vrot.lane.b32.xlu0 %v504, 112
        %v559 = vpop.permute.xlu0 %558
        %v560 = vsel %vm356, %v555, %v557
        %v561 = vsel %vm356, %v557, %v559
        %v564 = vld [vmem:[#allocation8] sm:$0xff]
        %v566 = vsel %vm362, %v564, 0
        %568 = vmatprep.subr.mxu0 %v477
        %569 = vmatpush1.msra.mxu0 %v476
        %570 = vmatprep.subr.mxu0 %v551
        %571 = vmatpush1.msra.mxu0 %v550
        %572 = vmatprep.subr.mxu0 %v489
        %573 = vmatpush1.msra.mxu0 %v488
        %574 = vmatprep.subr.mxu0 %v501
        %575 = vmatpush1.msra.mxu0 %v500
        %576 = vmatprep.subr.mxu0 %v462
        %577 = vmatpush1.msra.mxu0 %v461
        %578 = vmatprep.subr.mxu0 %v519
        %579 = vmatpush1.msra.mxu0 %v518
        %580 = vmatprep.subr.mxu0 %v531
        %581 = vmatpush1.msra.mxu0 %v530
        %582 = vmatprep.subr.mxu0 %v561
        %583 = vmatpush1.msra.mxu0 %v560
        %584 = vmatprep.subr.mxu0 %v543
        %585 = vmatpush1.msra.mxu0 %v542
        %586 = vmatprep.subr.mxu0 0.0
        %587 = vmatpush1.msra.mxu0 0.0
        %588 = vmatprep.subr.mxu0 0.0
        %589 = vmatpush1.msra.mxu0 0.0
        %590 = vmatprep.subr.mxu0 0.0
        %591 = vmatpush1.msra.mxu0 0.0
        %592 = vmatprep.subr.mxu0 0.0
        %593 = vmatpush1.msra.mxu0 0.0
        %594 = vmatprep.subr.mxu0 0.0
        %595 = vmatpush1.msra.mxu0 0.0
        %596 = vmatprep.subr.mxu0 0.0
        %597 = vmatpush1.msra.mxu0 0.0
        %598 = vmatprep.subr.mxu0 0.0
        %599 = vmatpush1.msra.mxu0 0.0
        %600 = vmatprep.subr.mxu0 0.0
        %601 = vmatpush1.msra.mxu0 0.0
        %602 = vmatprep.subr.mxu0 0.0
        %603 = vmatpush1.msra.mxu0 0.0
        %604 = vmatprep.subr.mxu0 0.0
        %605 = vmatpush1.msra.mxu0 0.0
        %606 = vmatprep.subr.mxu0 0.0
        %607 = vmatpush1.msra.mxu0 0.0
        %608 = vmatprep.subr.mxu0 0.0
        %609 = vmatpush1.msra.mxu0 0.0
        %610 = vmatprep.subr.mxu0 0.0
        %611 = vmatpush1.msra.mxu0 0.0
        %612 = vmatprep.subr.mxu0 0.0
        %613 = vmatpush1.msra.mxu0 0.0
        %614 = vmatprep.subr.mxu0 0.0
        %615 = vmatpush1.msra.mxu0 0.0
        %616 = vmatprep.subr.mxu0 0.0
        %617 = vmatpush1.msra.mxu0 0.0
        %618 = vmatprep.subr.mxu0 0.0
        %619 = vmatpush1.msra.mxu0 0.0
        %620 = vmatprep.subr.mxu0 0.0
        %621 = vmatpush1.msra.mxu0 0.0
        %622 = vmatprep.subr.mxu0 0.0
        %623 = vmatpush1.msra.mxu0 0.0
        %624 = vmatprep.subr.mxu0 0.0
        %625 = vmatpush1.msra.mxu0 0.0
        %626 = vmatprep.subr.mxu0 0.0
        %627 = vmatpush1.msra.mxu0 0.0
        %628 = vmatprep.subr.mxu0 0.0
        %629 = vmatpush1.msra.mxu0 0.0
        %630 = vmatprep.subr.mxu0 0.0
        %631 = vmatpush1.msra.mxu0 0.0
        %632 = vmatprep.mubr.f32.mxu0 0.0
        %633 = vmatmul.mubr.f32.gmra.mrb[0].mxu0 %v566
        %v634 = vpop.f32.mrb[0].mxu0
        %v635 = vadd.f32 0.0, %v634
        %v636 = vpop.f32.mrb[0].mxu0
        %v637 = vadd.f32 0.0, %v636
        %638 = vdwg.mxu0
        %v639 = vadd.f32 %v635, %v637
        %640 = vadd.xlane.f32.xlu0 %v639
        %v641 = vpop.xlane.xlu0 %640
        %v642 = vmul.f32 %v641, 0.00390625
        %v643 = vmul.f32 %v635, %v635
        %v644 = vmul.f32 %v637, %v637
        %v645 = vadd.f32 %v643, %v644
        %646 = vadd.xlane.f32.xlu0 %v645
        %v647 = vpop.xlane.xlu0 %646
        %v648 = vmul.f32 %v647, 0.00390625
        %v649 = vmul.f32 %v642, %v642
        %v650 = vsub.f32 %v648, %v649
        %v651 = vmax.f32 %v650, 0.0
        %v652 = vsub.f32 %v635, %v642
        %v653 = vsub.f32 %v637, %v642
        %v654 = vadd.f32 %v651, 1e-05
        %v655 = vrsqrt.pop %v654
        %v656 = vmul.f32 %v652, %v655
        %v657 = vmul.f32 %v653, %v655
        %v658 = vadd.f32 %v656, %v245
        %v659 = vadd.f32 %v657, %v246
        %v660 = vmax.f32 %v658, 0.0
        %v661 = vmax.f32 %v659, 0.0
        %662 = vst [vmem:[%s211] sm:$0xff] %v660
        %663 = vst [vmem:[%s211 + $0x8] sm:$0xff] %v661
        %s664 = sand.u32 %s97, 1
        %s665 = scalar_lea.sflag [#allocation5], %s664
        %s666 = sand.u32 %s97, 1
        %s667 = smul.addr %s666, 16
        %s668 = scalar_lea.vmem [#allocation9], %s667
        // Predicated region
        $region45: #{tpu_custom_call.1} parent=31 // pred_check
          %p669 = pneg %p107
        $region46: #{tpu_custom_call.1} parent=31 // pred_check_branch
          %671 = sbr.rel (%p669) target = $region48
        $region47: #{tpu_custom_call.1} parent=31 // pred_region
          %s673 = ssub.s32 256, 256
          %674 = vsyncadd %s665, %s673
          %s675 = smul.addr %s21, 2
          %s676 = smul.addr %s675, 128
          %s677 = scalar_lea.hbm %s3, %s676
          %s679 = sshll.u32 %s668, 4
          %s680 = int_to_ptr.vmem [resolvable:$true] %s679
          %682 = dma.vmem_to_hbm [thread:$0]  %s680, 256, %s677, %s665
        $region48: #{tpu_custom_call.1} parent=31 // pred_fallthru
          _
      $region32: #{tpu_custom_call.1} parent=5 // pred_fallthru
        _
      %p683 = scmp.le.s32.totalorder 2, %s16
      // Predicated region
      $region49: #{tpu_custom_call.1} parent=5 // pred_check
        %p684 = pneg %p683
      $region50: #{tpu_custom_call.1} parent=5 // pred_check_branch
        %686 = sbr.rel (%p684) target = $region52
      $region51: #{tpu_custom_call.1} parent=5 // pred_region
        %s687 = ssub.s32 %s16, 2
        // Predicated region
        $region53: #{tpu_custom_call.1} parent=51 // pred_check
          %p688 = pneg %p113
        $region54: #{tpu_custom_call.1} parent=51 // pred_check_branch
          %690 = sbr.rel (%p688) target = $region56
        $region55: #{tpu_custom_call.1} parent=51 // pred_region
          %s691 = sand.u32 %s98, 1
          %s692 = scalar_lea.sflag [#allocation5], %s691
          %s693 = sand.u32 %s98, 1
          %s694 = smul.addr %s693, 16
          %s695 = scalar_lea.vmem [#allocation9], %s694
          %696 = dma.done %s692, 256
        $region56: #{tpu_custom_call.1} parent=51 // pred_fallthru
          _
      $region52: #{tpu_custom_call.1} parent=5 // pred_fallthru
        _
    $region6: #{tpu_custom_call.1} parent=1 // loop_footer
      %s20 = sadd.s32 1, %s16
    $region7: #{tpu_custom_call.1} parent=1 // loop_footer_branch
      %15 = sbr.rel target = $region3
    $region8: #{tpu_custom_call.1} parent=1 // loop_exit
      _
    %697 = vsyncpa [#allocation4], 1
    %s698 = scalar_lea.sflag [#allocation4], 1
    %699 = vsyncpa %s698, 1
    %700 = vsyncpa [#allocation7], 1
    %701 = vsyncpa [#allocation5], 1
    %s702 = scalar_lea.sflag [#allocation5], 1
    %703 = vsyncpa %s702, 1

</llo_original>
